<compile_context>
chip_gen: v7x
topology: tpu7x:2x2x1
jax: 0.10.0
libtpu: 0.0.40
codegen_flags: <defaults>
</compile_context>

<pallas_src>
import math

import jax
import jax.numpy as jnp
from jax.experimental import pallas as pl
from jax.experimental.pallas import tpu as pltpu

_LANES = 128                              # vreg lane width
_SUBLANES = 8                             # vreg sublane count (32-bit dtypes)
_MAX_FOLD_LANES = 2048                    # cap on folded last-dim width
_TARGET_BLOCK_BYTES = 8 * 1024 * 1024     # ~8 MiB row tiles per review
_VMEM_LIMIT_BYTES = 48 * 1024 * 1024      # 2x(in+out) 8 MiB blocks + headroom


# -----------------------------------------------------------------------------
# Primary path: zero-HBM-traffic identity (aliased no-op kernel).
# -----------------------------------------------------------------------------
def _noop_identity_kernel(x_hbm_ref, o_hbm_ref):
    # Output is aliased to the input; both refs stay in HBM, so there is
    # nothing to load, compute, or store.
    del x_hbm_ref, o_hbm_ref


def identity(x):
    """Identity.forward(x) -> x as a zero-DMA, zero-compute Pallas call.

    The output is aliased to the input (input_output_aliases={0: 0}) and both
    refs live in HBM, so no DMA or compute is issued.  Callers should donate
    the input (jax.jit(..., donate_argnums=...)) to make this truly free;
    without donation XLA inserts one defensive copy (result still correct).
    Use `identity_copy` when a materialized out-of-place copy is wanted.
    """
    return pl.pallas_call(
        _noop_identity_kernel,
        out_shape=jax.ShapeDtypeStruct(x.shape, x.dtype),
        in_specs=[pl.BlockSpec(memory_space=pl.ANY)],   # stay in HBM, no auto-DMA
        out_specs=pl.BlockSpec(memory_space=pl.ANY),
        input_output_aliases={0: 0},                    # output 0 is input 0
    )(x)


# -----------------------------------------------------------------------------
# Secondary path: explicit out-of-place copy, tuned as a streaming 2D memcpy.
# -----------------------------------------------------------------------------
def _copy_kernel(x_ref, o_ref):
    o_ref[...] = x_ref[...]


def _lane_fold(n):
    """Largest power-of-two multiple of 128 dividing n, capped at 2048 lanes."""
    f = _LANES
    while f * 2 <= _MAX_FOLD_LANES and n % (f * 2) == 0:
        f *= 2
    return f


def _row_tile(r, f, itemsize):
    """Row-tile size: ~8 MiB blocks, sublane-aligned, >=2 grid steps if possible."""
    sub = _SUBLANES * max(1, 4 // itemsize)   # 8 (f32), 16 (bf16), 32 (int8)
    if r <= sub:
        return r                              # tiny: single full-extent block
    target_rows = max(sub, _TARGET_BLOCK_BYTES // (f * itemsize))
    tb = min(r, (target_rows // sub) * sub)
    if tb >= r and r >= 2 * sub:
        # Keep >=2 grid steps so ("parallel",) can shard across v7x's two TCs.
        half = -(-r // 2)
        tb = -(-half // sub) * sub            # round_up(ceil(r/2), sub) < r
    return tb


def _copy_2d_tiled(x2):
    """Streaming HBM->HBM copy of a (rows, f) slab, f a multiple of 128."""
    r, f = x2.shape
    tb = _row_tile(r, f, x2.dtype.itemsize)
    grid = pl.cdiv(r, tb)                     # ragged tail block is masked
    return pl.pallas_call(
        _copy_kernel,
        out_shape=jax.ShapeDtypeStruct((r, f), x2.dtype),
        grid_spec=pltpu.PrefetchScalarGridSpec(
            num_scalar_prefetch=0,
            grid=(grid,),
            in_specs=[pl.BlockSpec((tb, f), lambda i: (i, 0))],
            out_specs=pl.BlockSpec((tb, f), lambda i: (i, 0)),
        ),
        compiler_params=pltpu.CompilerParams(
            dimension_semantics=("parallel",),        # shard across v7x's 2 TCs
            vmem_limit_bytes=_VMEM_LIMIT_BYTES,       # room for 4 x 8 MiB buffers
        ),
    )(x2)


def _copy_small(x2):
    """Full-extent single-block copy; only used for <128-element remainders."""
    return pl.pallas_call(
        _copy_kernel,
        out_shape=jax.ShapeDtypeStruct(x2.shape, x2.dtype),
    )(x2)


def identity_copy(x):
    """Materialized identity copy: lane-dense, ~8 MiB-tiled HBM->HBM stream."""
    orig_shape = x.shape
    n = math.prod(orig_shape)
    if n == 0:
        return x                              # zero-element: nothing to move

    if n % _LANES == 0:
        f = _lane_fold(n)
        return _copy_2d_tiled(x.reshape(n // f, f)).reshape(orig_shape)

    # Un-128-aligned element count: stream the 128-aligned main slab through
    # the tiled kernel; copy the <128-element remainder as a tiny full block.
    flat = x.reshape(n)
    main_len = (n // _LANES) * _LANES
    rem_len = n - main_len
    rem = _copy_small(flat[main_len:].reshape(1, rem_len)).reshape(rem_len)
    if main_len == 0:
        return rem.reshape(orig_shape)
    f = _lane_fold(main_len)
    main = _copy_2d_tiled(flat[:main_len].reshape(main_len // f, f)).reshape(main_len)
    # TODO(synk): the concatenate costs one extra HBM pass for the main slab on
    # unaligned shapes; a single ragged-tail kernel over a 1D view would avoid it.
    return jnp.concatenate([main, rem]).reshape(orig_shape)


if __name__ == "__main__":
    key = jax.random.PRNGKey(0)
    x = jax.random.normal(key, (2, 4, 16, 16), dtype=jnp.float32)
    x_host = jax.device_get(x)  # snapshot (robust even if x gets donated)

    # Optimized out-of-place copy path (does not alias/donate x).
    out_copy = identity_copy(x)
    jax.block_until_ready(out_copy)
    assert out_copy.shape == x_host.shape and out_copy.dtype == x_host.dtype
    assert jnp.array_equal(out_copy, jnp.asarray(x_host))

    # Un-128-aligned shapes exercise the fixed slab+remainder fallback.
    for shape in [(3, 5, 7), (2, 131)]:
        key, sub_key = jax.random.split(key)
        y = jax.random.normal(sub_key, shape, dtype=jnp.float32)
        out_y = identity_copy(y)
        jax.block_until_ready(out_y)
        assert out_y.shape == y.shape and out_y.dtype == y.dtype
        assert jnp.array_equal(out_y, y)

    # Zero-traffic aliased no-op path.
    out = identity(x)
    jax.block_until_ready(out)
    assert out.shape == x_host.shape and out.dtype == x_host.dtype
    assert jnp.array_equal(out, jnp.asarray(x_host))

    print("KERNEL_OK")
</pallas_src>

<mosaic_0001>
module attributes {stable_mosaic.version = 11 : i64} {
  func.func @_copy_kernel(%arg0: i32, %arg1: memref<1x2048xf32, #tpu.memory_space<vmem>>, %arg2: memref<1x2048xf32, #tpu.memory_space<vmem>>) attributes {dimension_semantics = [#tpu.dimension_semantics<parallel>], iteration_bounds = array<i64: 1>, scalar_prefetch = 0 : i64, scratch_operands = 0 : i64, tpu.core_type = #tpu.core_type<tc>, window_params = [{transform_indices = @transform_0, window_bounds = array<i64: 1, 2048>}, {transform_indices = @transform_1, window_bounds = array<i64: 1, 2048>}]} {
    %c0 = arith.constant 0 : index
    %c0_0 = arith.constant 0 : index
    %0 = vector.load %arg1[%c0, %c0_0] : memref<1x2048xf32, #tpu.memory_space<vmem>>, vector<1x2048xf32>
    %c0_1 = arith.constant 0 : index
    %c0_2 = arith.constant 0 : index
    %1 = vector.load %arg2[%c0_1, %c0_2] : memref<1x2048xf32, #tpu.memory_space<vmem>>, vector<1x2048xf32>
    tpu.vector_store %arg2[%c0_1, %c0_2], %0 {strides = array<i32>} : memref<1x2048xf32, #tpu.memory_space<vmem>>, vector<1x2048xf32>,
    return
  }
  func.func @transform_0(%arg0: i32) -> (i32, i32) {
    %c0_i32 = arith.constant 0 : i32
    %c0_i32_0 = arith.constant 0 : i32
    return %arg0, %c0_i32 : i32, i32
  }
  func.func @transform_1(%arg0: i32) -> (i32, i32) {
    %c0_i32 = arith.constant 0 : i32
    %c0_i32_0 = arith.constant 0 : i32
    return %arg0, %c0_i32 : i32, i32
  }
}

</mosaic_0001>

<llo_original>
// kernel: tpu_custom_call.1
$region0: #{tpu_custom_call.1}
  #allocation0 [shape = 'u32[]', space=smem, size = 0x4, offset = 0x4, fixed_abs, tag = 'smem constant byte address 0x4 - core index']
  #allocation1 [shape = 'u32[144,128]{1,0:T(1,128)}', space=vmem, size = 0x12000, scoped, tag = 'internal scratch']
  %s0 = inlined_call_operand.hbm [shape: f32[1,2048], index: 0, kind: input, shape index: {}]
  %s1 = inlined_call_operand.hbm [shape: f32[1,2048], index: 1, kind: output, shape index: {}]
  %s2 = sld [smem:[#allocation0]]
  $region18: #{tpu_custom_call.1} parent=0
    _
  %s4 = ssub.s32 1, %s2
  %s5 = scalar_select 0, %s4, %s2
  $region1: #{tpu_custom_call.1} parent=0
    #allocation2 [shape = 'u8[8192]{0}', space=vmem, size = 0x2000, scoped, tag = 'input window, operand 0, single buffered']
    #allocation3 [shape = 's32[1]{0}', space=sflag, size = 0x4, scoped, tag = 'scoped memory for tpu_custom_call.1']
    #allocation4 [shape = 's32[1]{0}', space=sflag, size = 0x4, scoped, tag = 'scoped memory for tpu_custom_call.1']
    #allocation5 [shape = 'u8[8192]{0}', space=vmem, size = 0x2000, scoped, tag = 'output window, operand 0, single buffered']
    %6 = vsyncpa [#allocation3], 0
    %7 = vsyncpa [#allocation4], 0
    // Predicated region
    $region2: #{tpu_custom_call.1} parent=1 // pred_check
      _
    $region3: #{tpu_custom_call.1} parent=1 // pred_check_branch
      %9 = sbr.rel (0) target = $region5
    $region4: #{tpu_custom_call.1} parent=1 // pred_region
      %s11 = ssub.s32 256, 256
      %12 = vsyncadd [#allocation3], %s11
      %s14 = sshll.u32 [#allocation2], 4
      %s15 = int_to_ptr.vmem [resolvable:$true] %s14
      %17 = dma.hbm_to_vmem [thread:$0]  %s0, 256, %s15, [#allocation3]
    $region5: #{tpu_custom_call.1} parent=1 // pred_fallthru
      _
    // Predicated region
    $region6: #{tpu_custom_call.1} parent=1 // pred_check
      _
    $region7: #{tpu_custom_call.1} parent=1 // pred_check_branch
      %19 = sbr.rel (0) target = $region9
    $region8: #{tpu_custom_call.1} parent=1 // pred_region
      %20 = dma.done [#allocation3], 256
    $region9: #{tpu_custom_call.1} parent=1 // pred_fallthru
      _
    %v21 = vld [vmem:[#allocation2] sm:$0xff]
    %v22 = vld [vmem:[#allocation2 + $0x8] sm:$0xff]
    %23 = vst [vmem:[#allocation5] sm:$0xff] %v21
    %24 = vst [vmem:[#allocation5 + $0x8] sm:$0xff] %v22
    // Predicated region
    $region10: #{tpu_custom_call.1} parent=1 // pred_check
      _
    $region11: #{tpu_custom_call.1} parent=1 // pred_check_branch
      %26 = sbr.rel (0) target = $region13
    $region12: #{tpu_custom_call.1} parent=1 // pred_region
      %s28 = ssub.s32 256, 256
      %29 = vsyncadd [#allocation4], %s28
      %s31 = sshll.u32 [#allocation5], 4
      %s32 = int_to_ptr.vmem [resolvable:$true] %s31
      %34 = dma.vmem_to_hbm [thread:$0]  %s32, 256, %s1, [#allocation4]
    $region13: #{tpu_custom_call.1} parent=1 // pred_fallthru
      _
    // Predicated region
    $region14: #{tpu_custom_call.1} parent=1 // pred_check
      _
    $region15: #{tpu_custom_call.1} parent=1 // pred_check_branch
      %36 = sbr.rel (0) target = $region17
    $region16: #{tpu_custom_call.1} parent=1 // pred_region
      %37 = dma.done [#allocation4], 256
    $region17: #{tpu_custom_call.1} parent=1 // pred_fallthru
      _
    %38 = vsyncpa [#allocation3], 1
    %39 = vsyncpa [#allocation4], 1

</llo_original>
